<compile_context>
chip_gen: v7x
topology: tpu7x:2x2x1
jax: 0.10.0
libtpu: 0.0.40
codegen_flags: <defaults>
</compile_context>

<pallas_src>
import jax
import jax.numpy as jnp
from jax.experimental import pallas as pl
from jax.experimental.pallas import tpu as pltpu


def nli_fused_kernel(prem_ids_ref, hyp_ids_ref,   # SMEM int32 [B, S]
                     emb_ref,                      # VMEM [V, E]
                     w1a_ref, w1b_ref, b1_ref,     # VMEM [E, H], [E, H], [1, H]
                     w2_ref, b2_ref,               # VMEM [H, H], [1, H]
                     wp_ref, bp_ref,               # VMEM [1, H], [1, 1]
                     out_ref):                     # VMEM [B, 128]
    B, S = prem_ids_ref.shape

    def gather_maxpool(ids_ref):
        # Embedding lookup fused with max-pool over the sequence dimension:
        # gather one [1, E] row per token (dynamic sublane slice of the
        # VMEM-resident table) and keep a running elementwise max.
        rows = []
        for b in range(B):                 # B, S are small & static -> unrolled
            acc = emb_ref[pl.ds(ids_ref[b, 0], 1), :]
            for s in range(1, S):
                acc = jnp.maximum(acc, emb_ref[pl.ds(ids_ref[b, s], 1), :])
            rows.append(acc)
        return jnp.concatenate(rows, axis=0)       # [B, E]

    pooled_p = gather_maxpool(prem_ids_ref)        # [B, E]
    pooled_h = gather_maxpool(hyp_ids_ref)         # [B, E]

    # ff layer 1: Linear(2E -> H) + ReLU, with the concat folded into two dots.
    h = (jnp.dot(pooled_p, w1a_ref[...], preferred_element_type=jnp.float32)
         + jnp.dot(pooled_h, w1b_ref[...], preferred_element_type=jnp.float32)
         + b1_ref[...])
    h = jnp.maximum(h, 0.0)

    # ff layer 2: Linear(H -> H) + ReLU
    h = jnp.dot(h, w2_ref[...], preferred_element_type=jnp.float32) + b2_ref[...]
    h = jnp.maximum(h, 0.0)

    # prediction layer: Linear(H -> 1) done on the VPU/XLU (mul + lane reduce)
    # instead of a wasteful 1-column MXU matmul.
    logits = jnp.sum(h * wp_ref[...], axis=-1, keepdims=True) + bp_ref[...]  # [B, 1]
    out = jax.nn.sigmoid(logits)                                             # [B, 1]

    # Lane-dense store: broadcast across the 128-lane output and slice outside.
    out_ref[...] = jnp.broadcast_to(out, out_ref.shape)


def nli_forward(premise, hypothesis, emb_table, w1, b1, w2, b2, wp, bp):
    """premise / hypothesis: int32 [B, S] token ids."""
    B, S = premise.shape
    E = emb_table.shape[1]
    H = w1.shape[1]

    # Split the first layer's weight once so the kernel needs no feature concat.
    w1a = w1[:E]                 # multiplies pooled_premise
    w1b = w1[E:]                 # multiplies pooled_hypothesis
    wp_row = wp.reshape(1, H)    # [1, H] row for the VPU dot

    vmem = pl.BlockSpec(memory_space=pltpu.MemorySpace.VMEM)
    smem = pl.BlockSpec(memory_space=pltpu.MemorySpace.SMEM)

    out = pl.pallas_call(
        nli_fused_kernel,
        out_shape=jax.ShapeDtypeStruct((B, 128), jnp.float32),
        in_specs=[smem, smem] + [vmem] * 8,
        out_specs=vmem,
    )(premise.astype(jnp.int32), hypothesis.astype(jnp.int32),
      emb_table, w1a, w1b, b1, w2, b2, wp_row, bp)

    # squeeze(-1) as in the PyTorch module (only lane 0 carries the result)
    return out[:, 0]


def init_linear(key, in_features, out_features):
    """PyTorch nn.Linear default init: U(-1/sqrt(in), 1/sqrt(in))."""
    kw, kb = jax.random.split(key)
    bound = 1.0 / (in_features ** 0.5)
    # stored as [in, out] so the kernel does x @ W
    w = jax.random.uniform(kw, (in_features, out_features), jnp.float32,
                           minval=-bound, maxval=bound)
    b = jax.random.uniform(kb, (1, out_features), jnp.float32,
                           minval=-bound, maxval=bound)
    return w, b


if __name__ == "__main__":
    # Small, deterministic setup consistent with the module
    B, S = 2, 8            # batch, sequence length
    vocab_size = 50
    emb_dim = 32           # embedding.embedding_dim
    hidden_size = 32       # hidden_size
    # num_layers = 2 -> ff_layers = [Linear(2*E, H), Linear(H, H)]

    key = jax.random.PRNGKey(0)
    k_emb, k_l1, k_l2, k_lp, k_p, k_h = jax.random.split(key, 6)

    emb_table = jax.random.normal(k_emb, (vocab_size, emb_dim), jnp.float32)
    w1, b1 = init_linear(k_l1, emb_dim * 2, hidden_size)
    w2, b2 = init_linear(k_l2, hidden_size, hidden_size)
    wp, bp = init_linear(k_lp, hidden_size, 1)

    premise = jax.random.randint(k_p, (B, S), 0, vocab_size, dtype=jnp.int32)
    hypothesis = jax.random.randint(k_h, (B, S), 0, vocab_size, dtype=jnp.int32)

    out = nli_forward(premise, hypothesis, emb_table, w1, b1, w2, b2, wp, bp)
    out = jax.block_until_ready(out)

    # Reference check in plain JAX
    def ref_forward():
        pe = jnp.take(emb_table, premise, axis=0)
        he = jnp.take(emb_table, hypothesis, axis=0)
        x = jnp.concatenate([jnp.max(pe, axis=1), jnp.max(he, axis=1)], axis=1)
        x = jnp.maximum(x @ w1 + b1, 0.0)
        x = jnp.maximum(x @ w2 + b2, 0.0)
        logits = x @ wp + bp
        return jax.nn.sigmoid(logits)[:, 0]

    ref = ref_forward()
    assert out.shape == (B,), out.shape
    assert jnp.allclose(out, ref, atol=1e-5, rtol=1e-5), (out, ref)
    print("KERNEL_OK")
</pallas_src>

<mosaic_0001>
module attributes {stable_mosaic.version = 11 : i64} {
  func.func @nli_fused_kernel(%arg0: memref<2x8xi32, #tpu.memory_space<smem>>, %arg1: memref<2x8xi32, #tpu.memory_space<smem>>, %arg2: memref<50x32xf32, #tpu.memory_space<vmem>>, %arg3: memref<32x32xf32, #tpu.memory_space<vmem>>, %arg4: memref<32x32xf32, #tpu.memory_space<vmem>>, %arg5: memref<1x32xf32, #tpu.memory_space<vmem>>, %arg6: memref<32x32xf32, #tpu.memory_space<vmem>>, %arg7: memref<1x32xf32, #tpu.memory_space<vmem>>, %arg8: memref<1x32xf32, #tpu.memory_space<vmem>>, %arg9: memref<1x1xf32, #tpu.memory_space<vmem>>, %arg10: memref<2x128xf32, #tpu.memory_space<vmem>>) attributes {dimension_semantics = [], scalar_prefetch = 0 : i64, scratch_operands = 0 : i64, tpu.core_type = #tpu.core_type<tc>} {
    %c0 = arith.constant 0 : index
    %c0_0 = arith.constant 0 : index
    %0 = memref.load %arg0[%c0, %c0_0] : memref<2x8xi32, #tpu.memory_space<smem>>
    %1 = arith.index_cast %0 : i32 to index
    %c0_1 = arith.constant 0 : index
    %2 = vector.load %arg2[%1, %c0_1] : memref<50x32xf32, #tpu.memory_space<vmem>>, vector<1x32xf32>
    %c0_2 = arith.constant 0 : index
    %c1 = arith.constant 1 : index
    %3 = memref.load %arg0[%c0_2, %c1] : memref<2x8xi32, #tpu.memory_space<smem>>
    %4 = arith.index_cast %3 : i32 to index
    %c0_3 = arith.constant 0 : index
    %5 = vector.load %arg2[%4, %c0_3] : memref<50x32xf32, #tpu.memory_space<vmem>>, vector<1x32xf32>
    %6 = arith.maximumf %2, %5 : vector<1x32xf32>
    %c0_4 = arith.constant 0 : index
    %c2 = arith.constant 2 : index
    %7 = memref.load %arg0[%c0_4, %c2] : memref<2x8xi32, #tpu.memory_space<smem>>
    %8 = arith.index_cast %7 : i32 to index
    %c0_5 = arith.constant 0 : index
    %9 = vector.load %arg2[%8, %c0_5] : memref<50x32xf32, #tpu.memory_space<vmem>>, vector<1x32xf32>
    %10 = arith.maximumf %6, %9 : vector<1x32xf32>
    %c0_6 = arith.constant 0 : index
    %c3 = arith.constant 3 : index
    %11 = memref.load %arg0[%c0_6, %c3] : memref<2x8xi32, #tpu.memory_space<smem>>
    %12 = arith.index_cast %11 : i32 to index
    %c0_7 = arith.constant 0 : index
    %13 = vector.load %arg2[%12, %c0_7] : memref<50x32xf32, #tpu.memory_space<vmem>>, vector<1x32xf32>
    %14 = arith.maximumf %10, %13 : vector<1x32xf32>
    %c0_8 = arith.constant 0 : index
    %c4 = arith.constant 4 : index
    %15 = memref.load %arg0[%c0_8, %c4] : memref<2x8xi32, #tpu.memory_space<smem>>
    %16 = arith.index_cast %15 : i32 to index
    %c0_9 = arith.constant 0 : index
    %17 = vector.load %arg2[%16, %c0_9] : memref<50x32xf32, #tpu.memory_space<vmem>>, vector<1x32xf32>
    %18 = arith.maximumf %14, %17 : vector<1x32xf32>
    %c0_10 = arith.constant 0 : index
    %c5 = arith.constant 5 : index
    %19 = memref.load %arg0[%c0_10, %c5] : memref<2x8xi32, #tpu.memory_space<smem>>
    %20 = arith.index_cast %19 : i32 to index
    %c0_11 = arith.constant 0 : index
    %21 = vector.load %arg2[%20, %c0_11] : memref<50x32xf32, #tpu.memory_space<vmem>>, vector<1x32xf32>
    %22 = arith.maximumf %18, %21 : vector<1x32xf32>
    %c0_12 = arith.constant 0 : index
    %c6 = arith.constant 6 : index
    %23 = memref.load %arg0[%c0_12, %c6] : memref<2x8xi32, #tpu.memory_space<smem>>
    %24 = arith.index_cast %23 : i32 to index
    %c0_13 = arith.constant 0 : index
    %25 = vector.load %arg2[%24, %c0_13] : memref<50x32xf32, #tpu.memory_space<vmem>>, vector<1x32xf32>
    %26 = arith.maximumf %22, %25 : vector<1x32xf32>
    %c0_14 = arith.constant 0 : index
    %c7 = arith.constant 7 : index
    %27 = memref.load %arg0[%c0_14, %c7] : memref<2x8xi32, #tpu.memory_space<smem>>
    %28 = arith.index_cast %27 : i32 to index
    %c0_15 = arith.constant 0 : index
    %29 = vector.load %arg2[%28, %c0_15] : memref<50x32xf32, #tpu.memory_space<vmem>>, vector<1x32xf32>
    %30 = arith.maximumf %26, %29 : vector<1x32xf32>
    %c1_16 = arith.constant 1 : index
    %c0_17 = arith.constant 0 : index
    %31 = memref.load %arg0[%c1_16, %c0_17] : memref<2x8xi32, #tpu.memory_space<smem>>
    %32 = arith.index_cast %31 : i32 to index
    %c0_18 = arith.constant 0 : index
    %33 = vector.load %arg2[%32, %c0_18] : memref<50x32xf32, #tpu.memory_space<vmem>>, vector<1x32xf32>
    %c1_19 = arith.constant 1 : index
    %c1_20 = arith.constant 1 : index
    %34 = memref.load %arg0[%c1_19, %c1_20] : memref<2x8xi32, #tpu.memory_space<smem>>
    %35 = arith.index_cast %34 : i32 to index
    %c0_21 = arith.constant 0 : index
    %36 = vector.load %arg2[%35, %c0_21] : memref<50x32xf32, #tpu.memory_space<vmem>>, vector<1x32xf32>
    %37 = arith.maximumf %33, %36 : vector<1x32xf32>
    %c1_22 = arith.constant 1 : index
    %c2_23 = arith.constant 2 : index
    %38 = memref.load %arg0[%c1_22, %c2_23] : memref<2x8xi32, #tpu.memory_space<smem>>
    %39 = arith.index_cast %38 : i32 to index
    %c0_24 = arith.constant 0 : index
    %40 = vector.load %arg2[%39, %c0_24] : memref<50x32xf32, #tpu.memory_space<vmem>>, vector<1x32xf32>
    %41 = arith.maximumf %37, %40 : vector<1x32xf32>
    %c1_25 = arith.constant 1 : index
    %c3_26 = arith.constant 3 : index
    %42 = memref.load %arg0[%c1_25, %c3_26] : memref<2x8xi32, #tpu.memory_space<smem>>
    %43 = arith.index_cast %42 : i32 to index
    %c0_27 = arith.constant 0 : index
    %44 = vector.load %arg2[%43, %c0_27] : memref<50x32xf32, #tpu.memory_space<vmem>>, vector<1x32xf32>
    %45 = arith.maximumf %41, %44 : vector<1x32xf32>
    %c1_28 = arith.constant 1 : index
    %c4_29 = arith.constant 4 : index
    %46 = memref.load %arg0[%c1_28, %c4_29] : memref<2x8xi32, #tpu.memory_space<smem>>
    %47 = arith.index_cast %46 : i32 to index
    %c0_30 = arith.constant 0 : index
    %48 = vector.load %arg2[%47, %c0_30] : memref<50x32xf32, #tpu.memory_space<vmem>>, vector<1x32xf32>
    %49 = arith.maximumf %45, %48 : vector<1x32xf32>
    %c1_31 = arith.constant 1 : index
    %c5_32 = arith.constant 5 : index
    %50 = memref.load %arg0[%c1_31, %c5_32] : memref<2x8xi32, #tpu.memory_space<smem>>
    %51 = arith.index_cast %50 : i32 to index
    %c0_33 = arith.constant 0 : index
    %52 = vector.load %arg2[%51, %c0_33] : memref<50x32xf32, #tpu.memory_space<vmem>>, vector<1x32xf32>
    %53 = arith.maximumf %49, %52 : vector<1x32xf32>
    %c1_34 = arith.constant 1 : index
    %c6_35 = arith.constant 6 : index
    %54 = memref.load %arg0[%c1_34, %c6_35] : memref<2x8xi32, #tpu.memory_space<smem>>
    %55 = arith.index_cast %54 : i32 to index
    %c0_36 = arith.constant 0 : index
    %56 = vector.load %arg2[%55, %c0_36] : memref<50x32xf32, #tpu.memory_space<vmem>>, vector<1x32xf32>
    %57 = arith.maximumf %53, %56 : vector<1x32xf32>
    %c1_37 = arith.constant 1 : index
    %c7_38 = arith.constant 7 : index
    %58 = memref.load %arg0[%c1_37, %c7_38] : memref<2x8xi32, #tpu.memory_space<smem>>
    %59 = arith.index_cast %58 : i32 to index
    %c0_39 = arith.constant 0 : index
    %60 = vector.load %arg2[%59, %c0_39] : memref<50x32xf32, #tpu.memory_space<vmem>>, vector<1x32xf32>
    %61 = arith.maximumf %57, %60 : vector<1x32xf32>
    %62 = tpu.concatenate %30, %61 in 0 : vector<1x32xf32>, vector<1x32xf32> -> vector<2x32xf32>
    %c0_40 = arith.constant 0 : index
    %c0_41 = arith.constant 0 : index
    %63 = memref.load %arg1[%c0_40, %c0_41] : memref<2x8xi32, #tpu.memory_space<smem>>
    %64 = arith.index_cast %63 : i32 to index
    %c0_42 = arith.constant 0 : index
    %65 = vector.load %arg2[%64, %c0_42] : memref<50x32xf32, #tpu.memory_space<vmem>>, vector<1x32xf32>
    %c0_43 = arith.constant 0 : index
    %c1_44 = arith.constant 1 : index
    %66 = memref.load %arg1[%c0_43, %c1_44] : memref<2x8xi32, #tpu.memory_space<smem>>
    %67 = arith.index_cast %66 : i32 to index
    %c0_45 = arith.constant 0 : index
    %68 = vector.load %arg2[%67, %c0_45] : memref<50x32xf32, #tpu.memory_space<vmem>>, vector<1x32xf32>
    %69 = arith.maximumf %65, %68 : vector<1x32xf32>
    %c0_46 = arith.constant 0 : index
    %c2_47 = arith.constant 2 : index
    %70 = memref.load %arg1[%c0_46, %c2_47] : memref<2x8xi32, #tpu.memory_space<smem>>
    %71 = arith.index_cast %70 : i32 to index
    %c0_48 = arith.constant 0 : index
    %72 = vector.load %arg2[%71, %c0_48] : memref<50x32xf32, #tpu.memory_space<vmem>>, vector<1x32xf32>
    %73 = arith.maximumf %69, %72 : vector<1x32xf32>
    %c0_49 = arith.constant 0 : index
    %c3_50 = arith.constant 3 : index
    %74 = memref.load %arg1[%c0_49, %c3_50] : memref<2x8xi32, #tpu.memory_space<smem>>
    %75 = arith.index_cast %74 : i32 to index
    %c0_51 = arith.constant 0 : index
    %76 = vector.load %arg2[%75, %c0_51] : memref<50x32xf32, #tpu.memory_space<vmem>>, vector<1x32xf32>
    %77 = arith.maximumf %73, %76 : vector<1x32xf32>
    %c0_52 = arith.constant 0 : index
    %c4_53 = arith.constant 4 : index
    %78 = memref.load %arg1[%c0_52, %c4_53] : memref<2x8xi32, #tpu.memory_space<smem>>
    %79 = arith.index_cast %78 : i32 to index
    %c0_54 = arith.constant 0 : index
    %80 = vector.load %arg2[%79, %c0_54] : memref<50x32xf32, #tpu.memory_space<vmem>>, vector<1x32xf32>
    %81 = arith.maximumf %77, %80 : vector<1x32xf32>
    %c0_55 = arith.constant 0 : index
    %c5_56 = arith.constant 5 : index
    %82 = memref.load %arg1[%c0_55, %c5_56] : memref<2x8xi32, #tpu.memory_space<smem>>
    %83 = arith.index_cast %82 : i32 to index
    %c0_57 = arith.constant 0 : index
    %84 = vector.load %arg2[%83, %c0_57] : memref<50x32xf32, #tpu.memory_space<vmem>>, vector<1x32xf32>
    %85 = arith.maximumf %81, %84 : vector<1x32xf32>
    %c0_58 = arith.constant 0 : index
    %c6_59 = arith.constant 6 : index
    %86 = memref.load %arg1[%c0_58, %c6_59] : memref<2x8xi32, #tpu.memory_space<smem>>
    %87 = arith.index_cast %86 : i32 to index
    %c0_60 = arith.constant 0 : index
    %88 = vector.load %arg2[%87, %c0_60] : memref<50x32xf32, #tpu.memory_space<vmem>>, vector<1x32xf32>
    %89 = arith.maximumf %85, %88 : vector<1x32xf32>
    %c0_61 = arith.constant 0 : index
    %c7_62 = arith.constant 7 : index
    %90 = memref.load %arg1[%c0_61, %c7_62] : memref<2x8xi32, #tpu.memory_space<smem>>
    %91 = arith.index_cast %90 : i32 to index
    %c0_63 = arith.constant 0 : index
    %92 = vector.load %arg2[%91, %c0_63] : memref<50x32xf32, #tpu.memory_space<vmem>>, vector<1x32xf32>
    %93 = arith.maximumf %89, %92 : vector<1x32xf32>
    %c1_64 = arith.constant 1 : index
    %c0_65 = arith.constant 0 : index
    %94 = memref.load %arg1[%c1_64, %c0_65] : memref<2x8xi32, #tpu.memory_space<smem>>
    %95 = arith.index_cast %94 : i32 to index
    %c0_66 = arith.constant 0 : index
    %96 = vector.load %arg2[%95, %c0_66] : memref<50x32xf32, #tpu.memory_space<vmem>>, vector<1x32xf32>
    %c1_67 = arith.constant 1 : index
    %c1_68 = arith.constant 1 : index
    %97 = memref.load %arg1[%c1_67, %c1_68] : memref<2x8xi32, #tpu.memory_space<smem>>
    %98 = arith.index_cast %97 : i32 to index
    %c0_69 = arith.constant 0 : index
    %99 = vector.load %arg2[%98, %c0_69] : memref<50x32xf32, #tpu.memory_space<vmem>>, vector<1x32xf32>
    %100 = arith.maximumf %96, %99 : vector<1x32xf32>
    %c1_70 = arith.constant 1 : index
    %c2_71 = arith.constant 2 : index
    %101 = memref.load %arg1[%c1_70, %c2_71] : memref<2x8xi32, #tpu.memory_space<smem>>
    %102 = arith.index_cast %101 : i32 to index
    %c0_72 = arith.constant 0 : index
    %103 = vector.load %arg2[%102, %c0_72] : memref<50x32xf32, #tpu.memory_space<vmem>>, vector<1x32xf32>
    %104 = arith.maximumf %100, %103 : vector<1x32xf32>
    %c1_73 = arith.constant 1 : index
    %c3_74 = arith.constant 3 : index
    %105 = memref.load %arg1[%c1_73, %c3_74] : memref<2x8xi32, #tpu.memory_space<smem>>
    %106 = arith.index_cast %105 : i32 to index
    %c0_75 = arith.constant 0 : index
    %107 = vector.load %arg2[%106, %c0_75] : memref<50x32xf32, #tpu.memory_space<vmem>>, vector<1x32xf32>
    %108 = arith.maximumf %104, %107 : vector<1x32xf32>
    %c1_76 = arith.constant 1 : index
    %c4_77 = arith.constant 4 : index
    %109 = memref.load %arg1[%c1_76, %c4_77] : memref<2x8xi32, #tpu.memory_space<smem>>
    %110 = arith.index_cast %109 : i32 to index
    %c0_78 = arith.constant 0 : index
    %111 = vector.load %arg2[%110, %c0_78] : memref<50x32xf32, #tpu.memory_space<vmem>>, vector<1x32xf32>
    %112 = arith.maximumf %108, %111 : vector<1x32xf32>
    %c1_79 = arith.constant 1 : index
    %c5_80 = arith.constant 5 : index
    %113 = memref.load %arg1[%c1_79, %c5_80] : memref<2x8xi32, #tpu.memory_space<smem>>
    %114 = arith.index_cast %113 : i32 to index
    %c0_81 = arith.constant 0 : index
    %115 = vector.load %arg2[%114, %c0_81] : memref<50x32xf32, #tpu.memory_space<vmem>>, vector<1x32xf32>
    %116 = arith.maximumf %112, %115 : vector<1x32xf32>
    %c1_82 = arith.constant 1 : index
    %c6_83 = arith.constant 6 : index
    %117 = memref.load %arg1[%c1_82, %c6_83] : memref<2x8xi32, #tpu.memory_space<smem>>
    %118 = arith.index_cast %117 : i32 to index
    %c0_84 = arith.constant 0 : index
    %119 = vector.load %arg2[%118, %c0_84] : memref<50x32xf32, #tpu.memory_space<vmem>>, vector<1x32xf32>
    %120 = arith.maximumf %116, %119 : vector<1x32xf32>
    %c1_85 = arith.constant 1 : index
    %c7_86 = arith.constant 7 : index
    %121 = memref.load %arg1[%c1_85, %c7_86] : memref<2x8xi32, #tpu.memory_space<smem>>
    %122 = arith.index_cast %121 : i32 to index
    %c0_87 = arith.constant 0 : index
    %123 = vector.load %arg2[%122, %c0_87] : memref<50x32xf32, #tpu.memory_space<vmem>>, vector<1x32xf32>
    %124 = arith.maximumf %120, %123 : vector<1x32xf32>
    %125 = tpu.concatenate %93, %124 in 0 : vector<1x32xf32>, vector<1x32xf32> -> vector<2x32xf32>
    %c0_88 = arith.constant 0 : index
    %c0_89 = arith.constant 0 : index
    %126 = vector.load %arg3[%c0_88, %c0_89] : memref<32x32xf32, #tpu.memory_space<vmem>>, vector<32x32xf32>
    %cst = arith.constant dense<0.000000e+00> : vector<2x32xf32>
    %127 = tpu.matmul %62, %126, %cst {dimension_numbers = #tpu.dot_dimension_numbers<[1], [0], [0], [1], [0, 0, 1, 1], [], []>} : vector<2x32xf32>, vector<32x32xf32>, vector<2x32xf32> -> vector<2x32xf32>
    %c0_90 = arith.constant 0 : index
    %c0_91 = arith.constant 0 : index
    %128 = vector.load %arg4[%c0_90, %c0_91] : memref<32x32xf32, #tpu.memory_space<vmem>>, vector<32x32xf32>
    %cst_92 = arith.constant dense<0.000000e+00> : vector<2x32xf32>
    %129 = tpu.matmul %125, %128, %cst_92 {dimension_numbers = #tpu.dot_dimension_numbers<[1], [0], [0], [1], [0, 0, 1, 1], [], []>} : vector<2x32xf32>, vector<32x32xf32>, vector<2x32xf32> -> vector<2x32xf32>
    %130 = arith.addf %127, %129 : vector<2x32xf32>
    %c0_93 = arith.constant 0 : index
    %c0_94 = arith.constant 0 : index
    %131 = vector.load %arg5[%c0_93, %c0_94] : memref<1x32xf32, #tpu.memory_space<vmem>>, vector<1x32xf32>
    %132 = vector.broadcast %131 : vector<1x32xf32> to vector<2x32xf32>
    %133 = arith.addf %130, %132 : vector<2x32xf32>
    %cst_95 = arith.constant 0.000000e+00 : f32
    %134 = vector.broadcast %cst_95 : f32 to vector<2x32xf32>
    %135 = arith.maximumf %133, %134 : vector<2x32xf32>
    %c0_96 = arith.constant 0 : index
    %c0_97 = arith.constant 0 : index
    %136 = vector.load %arg6[%c0_96, %c0_97] : memref<32x32xf32, #tpu.memory_space<vmem>>, vector<32x32xf32>
    %cst_98 = arith.constant dense<0.000000e+00> : vector<2x32xf32>
    %137 = tpu.matmul %135, %136, %cst_98 {dimension_numbers = #tpu.dot_dimension_numbers<[1], [0], [0], [1], [0, 0, 1, 1], [], []>} : vector<2x32xf32>, vector<32x32xf32>, vector<2x32xf32> -> vector<2x32xf32>
    %c0_99 = arith.constant 0 : index
    %c0_100 = arith.constant 0 : index
    %138 = vector.load %arg7[%c0_99, %c0_100] : memref<1x32xf32, #tpu.memory_space<vmem>>, vector<1x32xf32>
    %139 = vector.broadcast %138 : vector<1x32xf32> to vector<2x32xf32>
    %140 = arith.addf %137, %139 : vector<2x32xf32>
    %cst_101 = arith.constant 0.000000e+00 : f32
    %141 = vector.broadcast %cst_101 : f32 to vector<2x32xf32>
    %142 = arith.maximumf %140, %141 : vector<2x32xf32>
    %c0_102 = arith.constant 0 : index
    %c0_103 = arith.constant 0 : index
    %143 = vector.load %arg8[%c0_102, %c0_103] : memref<1x32xf32, #tpu.memory_space<vmem>>, vector<1x32xf32>
    %144 = vector.broadcast %143 : vector<1x32xf32> to vector<2x32xf32>
    %145 = arith.mulf %142, %144 : vector<2x32xf32>
    %cst_104 = arith.constant dense<0.000000e+00> : vector<2xf32>
    %146 = vector.multi_reduction <add>, %145, %cst_104 [1] : vector<2x32xf32> to vector<2xf32>
    %147 = vector.shape_cast %146 : vector<2xf32> to vector<2x1xf32>
    %c0_105 = arith.constant 0 : index
    %c0_106 = arith.constant 0 : index
    %148 = vector.load %arg9[%c0_105, %c0_106] : memref<1x1xf32, #tpu.memory_space<vmem>>, vector<1x1xf32>
    %149 = vector.broadcast %148 : vector<1x1xf32> to vector<2x1xf32>
    %150 = arith.addf %147, %149 : vector<2x1xf32>
    %151 = arith.negf %150 : vector<2x1xf32>
    %152 = math.exp %151 : vector<2x1xf32>
    %cst_107 = arith.constant 1.000000e+00 : f32
    %153 = vector.broadcast %cst_107 : f32 to vector<2x1xf32>
    %154 = arith.addf %153, %152 : vector<2x1xf32>
    %155 = arith.divf %153, %154 : vector<2x1xf32>
    %156 = vector.shape_cast %155 : vector<2x1xf32> to vector<2x1xf32>
    %157 = vector.broadcast %156 : vector<2x1xf32> to vector<2x128xf32>
    %c0_108 = arith.constant 0 : index
    %c0_109 = arith.constant 0 : index
    %158 = vector.load %arg10[%c0_108, %c0_109] : memref<2x128xf32, #tpu.memory_space<vmem>>, vector<2x128xf32>
    tpu.vector_store %arg10[%c0_108, %c0_109], %157 {strides = array<i32>} : memref<2x128xf32, #tpu.memory_space<vmem>>, vector<2x128xf32>,
    return
  }
}

</mosaic_0001>

<llo_original>
// kernel: tpu_custom_call.1
$region0: #{tpu_custom_call.1}
  #allocation0 [shape = 'u32[]', space=smem, size = 0x4, offset = 0x4, fixed_abs, tag = 'smem constant byte address 0x4 - core index']
  #allocation1 [shape = 'u32[144,128]{1,0:T(1,128)}', space=vmem, size = 0x12000, scoped, tag = 'internal scratch']
  #allocation2 [shape = 'f32[1,1]{1,0:T(1,128)S(1)}', space=vmem, size = 0x200, scoped, tag = 'scoped memory for tpu_custom_call.1']
  %s0 = inlined_call_operand.vmem [shape: s32[2,8], index: 0, kind: input, shape index: {}]
  %s1 = inlined_call_operand.hbm [shape: s32[2,8], index: 1, kind: input, shape index: {}]
  %s2 = inlined_call_operand.vmem [shape: f32[50,32], index: 2, kind: input, shape index: {}]
  %s3 = inlined_call_operand.vmem [shape: f32[32,32], index: 3, kind: input, shape index: {}]
  %s4 = inlined_call_operand.vmem [shape: f32[32,32], index: 4, kind: input, shape index: {}]
  %s5 = inlined_call_operand.vmem [shape: f32[1,32], index: 5, kind: input, shape index: {}]
  %s6 = inlined_call_operand.vmem [shape: f32[32,32], index: 6, kind: input, shape index: {}]
  %s7 = inlined_call_operand.vmem [shape: f32[1,32], index: 7, kind: input, shape index: {}]
  %s8 = inlined_call_operand.vmem [shape: f32[1,32], index: 8, kind: input, shape index: {}]
  %s9 = inlined_call_operand.<no memory space> [shape: f32[1,1], index: 9, kind: input, shape index: {}]
  %s10 = inlined_call_operand.hbm [shape: f32[2,128], index: 10, kind: output, shape index: {}]
  %s11 = sld [smem:[#allocation0]]
  $region58: #{tpu_custom_call.1} parent=0
    _
  %s13 = ssub.s32 1, %s11
  %s14 = scalar_select 0, %s13, %s11
  %v15 = vstv %s9
  %16 = vst [vmem:[#allocation2] sm:$0x1] %v15
  $region1: #{tpu_custom_call.1} parent=0
    #allocation3 [shape = 'u8[1024]{0}', space=smem, size = 0x400, scoped, tag = 'input window, operand 0, single buffered']
    #allocation4 [shape = 's32[1]{0}', space=sflag, size = 0x4, scoped, tag = 'scoped memory for tpu_custom_call.1']
    #allocation5 [shape = 's32[1]{0}', space=sflag, size = 0x4, scoped, tag = 'scoped memory for tpu_custom_call.1']
    #allocation6 [shape = 's32[1]{0}', space=sflag, size = 0x4, scoped, tag = 'scoped memory for tpu_custom_call.1']
    #allocation7 [shape = 'u8[1024]{0}', space=smem, size = 0x400, scoped, tag = 'input window, operand 1, single buffered']
    #allocation8 [shape = 'u8[1024]{0}', space=vmem, size = 0x400, scoped, tag = 'output window, operand 0, single buffered']
    %17 = vsyncpa [#allocation6], 0
    %18 = vsyncpa [#allocation5], 0
    %19 = vsyncpa [#allocation4], 0
    // Predicated region
    $region2: #{tpu_custom_call.1} parent=1 // pred_check
      _
    $region3: #{tpu_custom_call.1} parent=1 // pred_check_branch
      %21 = sbr.rel (0) target = $region5
    $region4: #{tpu_custom_call.1} parent=1 // pred_region
      %s23 = ssub.s32 32, 32
      %24 = vsyncadd [#allocation6], %s23
      %s26 = sshll.u32 %s0, 4
      %s27 = int_to_ptr.vmem [resolvable:$true] %s26
      %29 = dma.vmem_to_smem %s27, 32, [#allocation3], [#allocation6]
    $region5: #{tpu_custom_call.1} parent=1 // pred_fallthru
      _
    // Predicated region
    $region6: #{tpu_custom_call.1} parent=1 // pred_check
      _
    $region7: #{tpu_custom_call.1} parent=1 // pred_check_branch
      %31 = sbr.rel (0) target = $region9
    $region8: #{tpu_custom_call.1} parent=1 // pred_region
      %s33 = ssub.s32 32, 32
      %34 = vsyncadd [#allocation5], %s33
      %37 = dma.hbm_to_smem %s1, 32, [#allocation7], [#allocation5]
    $region9: #{tpu_custom_call.1} parent=1 // pred_fallthru
      _
    // Predicated region
    $region10: #{tpu_custom_call.1} parent=1 // pred_check
      _
    $region11: #{tpu_custom_call.1} parent=1 // pred_check_branch
      %39 = sbr.rel (0) target = $region13
    $region12: #{tpu_custom_call.1} parent=1 // pred_region
      _
    $region13: #{tpu_custom_call.1} parent=1 // pred_fallthru
      _
    // Predicated region
    $region14: #{tpu_custom_call.1} parent=1 // pred_check
      _
    $region15: #{tpu_custom_call.1} parent=1 // pred_check_branch
      %41 = sbr.rel (0) target = $region17
    $region16: #{tpu_custom_call.1} parent=1 // pred_region
      _
    $region17: #{tpu_custom_call.1} parent=1 // pred_fallthru
      _
    // Predicated region
    $region18: #{tpu_custom_call.1} parent=1 // pred_check
      _
    $region19: #{tpu_custom_call.1} parent=1 // pred_check_branch
      %43 = sbr.rel (0) target = $region21
    $region20: #{tpu_custom_call.1} parent=1 // pred_region
      _
    $region21: #{tpu_custom_call.1} parent=1 // pred_fallthru
      _
    // Predicated region
    $region22: #{tpu_custom_call.1} parent=1 // pred_check
      _
    $region23: #{tpu_custom_call.1} parent=1 // pred_check_branch
      %45 = sbr.rel (0) target = $region25
    $region24: #{tpu_custom_call.1} parent=1 // pred_region
      _
    $region25: #{tpu_custom_call.1} parent=1 // pred_fallthru
      _
    // Predicated region
    $region26: #{tpu_custom_call.1} parent=1 // pred_check
      _
    $region27: #{tpu_custom_call.1} parent=1 // pred_check_branch
      %47 = sbr.rel (0) target = $region29
    $region28: #{tpu_custom_call.1} parent=1 // pred_region
      _
    $region29: #{tpu_custom_call.1} parent=1 // pred_fallthru
      _
    // Predicated region
    $region30: #{tpu_custom_call.1} parent=1 // pred_check
      _
    $region31: #{tpu_custom_call.1} parent=1 // pred_check_branch
      %49 = sbr.rel (0) target = $region33
    $region32: #{tpu_custom_call.1} parent=1 // pred_region
      _
    $region33: #{tpu_custom_call.1} parent=1 // pred_fallthru
      _
    // Predicated region
    $region34: #{tpu_custom_call.1} parent=1 // pred_check
      _
    $region35: #{tpu_custom_call.1} parent=1 // pred_check_branch
      %51 = sbr.rel (0) target = $region37
    $region36: #{tpu_custom_call.1} parent=1 // pred_region
      _
    $region37: #{tpu_custom_call.1} parent=1 // pred_fallthru
      _
    // Predicated region
    $region38: #{tpu_custom_call.1} parent=1 // pred_check
      _
    $region39: #{tpu_custom_call.1} parent=1 // pred_check_branch
      %53 = sbr.rel (0) target = $region41
    $region40: #{tpu_custom_call.1} parent=1 // pred_region
      _
    $region41: #{tpu_custom_call.1} parent=1 // pred_fallthru
      _
    // Predicated region
    $region42: #{tpu_custom_call.1} parent=1 // pred_check
      _
    $region43: #{tpu_custom_call.1} parent=1 // pred_check_branch
      %55 = sbr.rel (0) target = $region45
    $region44: #{tpu_custom_call.1} parent=1 // pred_region
      %56 = dma.done [#allocation6], 32
    $region45: #{tpu_custom_call.1} parent=1 // pred_fallthru
      _
    // Predicated region
    $region46: #{tpu_custom_call.1} parent=1 // pred_check
      _
    $region47: #{tpu_custom_call.1} parent=1 // pred_check_branch
      %58 = sbr.rel (0) target = $region49
    $region48: #{tpu_custom_call.1} parent=1 // pred_region
      %59 = dma.done [#allocation5], 32
    $region49: #{tpu_custom_call.1} parent=1 // pred_fallthru
      _
    %60 = sfence
    %s61 = sld [smem:[#allocation3]]
    %s62 = scalar_lea.vmem %s2, %s61
    %v63 = vld [vmem:[%s62] sm:$0x1]
    %s64 = sld [smem:[#allocation3 + $0x1]]
    %s65 = scalar_lea.vmem %s2, %s64
    %v66 = vld [vmem:[%s65] sm:$0x1]
    %v67 = vmax.f32 %v63, %v66
    %s68 = sld [smem:[#allocation3 + $0x2]]
    %s69 = scalar_lea.vmem %s2, %s68
    %v70 = vld [vmem:[%s69] sm:$0x1]
    %v71 = vmax.f32 %v67, %v70
    %s72 = sld [smem:[#allocation3 + $0x3]]
    %s73 = scalar_lea.vmem %s2, %s72
    %v74 = vld [vmem:[%s73] sm:$0x1]
    %v75 = vmax.f32 %v71, %v74
    %s76 = sld [smem:[#allocation3 + $0x4]]
    %s77 = scalar_lea.vmem %s2, %s76
    %v78 = vld [vmem:[%s77] sm:$0x1]
    %v79 = vmax.f32 %v75, %v78
    %s80 = sld [smem:[#allocation3 + $0x5]]
    %s81 = scalar_lea.vmem %s2, %s80
    %v82 = vld [vmem:[%s81] sm:$0x1]
    %v83 = vmax.f32 %v79, %v82
    %s84 = sld [smem:[#allocation3 + $0x6]]
    %s85 = scalar_lea.vmem %s2, %s84
    %v86 = vld [vmem:[%s85] sm:$0x1]
    %v87 = vmax.f32 %v83, %v86
    %s88 = sld [smem:[#allocation3 + $0x7]]
    %s89 = scalar_lea.vmem %s2, %s88
    %v90 = vld [vmem:[%s89] sm:$0x1]
    %v91 = vmax.f32 %v87, %v90
    %s92 = sld [smem:[#allocation3 + $0x80]]
    %s93 = scalar_lea.vmem %s2, %s92
    %v94 = vld [vmem:[%s93] sm:$0x1]
    %s95 = sld [smem:[#allocation3 + $0x81]]
    %s96 = scalar_lea.vmem %s2, %s95
    %v97 = vld [vmem:[%s96] sm:$0x1]
    %v98 = vmax.f32 %v94, %v97
    %s99 = sld [smem:[#allocation3 + $0x82]]
    %s100 = scalar_lea.vmem %s2, %s99
    %v101 = vld [vmem:[%s100] sm:$0x1]
    %v102 = vmax.f32 %v98, %v101
    %s103 = sld [smem:[#allocation3 + $0x83]]
    %s104 = scalar_lea.vmem %s2, %s103
    %v105 = vld [vmem:[%s104] sm:$0x1]
    %v106 = vmax.f32 %v102, %v105
    %s107 = sld [smem:[#allocation3 + $0x84]]
    %s108 = scalar_lea.vmem %s2, %s107
    %v109 = vld [vmem:[%s108] sm:$0x1]
    %v110 = vmax.f32 %v106, %v109
    %s111 = sld [smem:[#allocation3 + $0x85]]
    %s112 = scalar_lea.vmem %s2, %s111
    %v113 = vld [vmem:[%s112] sm:$0x1]
    %v114 = vmax.f32 %v110, %v113
    %s115 = sld [smem:[#allocation3 + $0x86]]
    %s116 = scalar_lea.vmem %s2, %s115
    %v117 = vld [vmem:[%s116] sm:$0x1]
    %v118 = vmax.f32 %v114, %v117
    %s119 = sld [smem:[#allocation3 + $0x87]]
    %s120 = scalar_lea.vmem %s2, %s119
    %v121 = vld [vmem:[%s120] sm:$0x1]
    %v122 = vmax.f32 %v118, %v121
    %v124 = vrot.slane %v122, 7
    %vm126 = vcmask 1040384
    %v127 = vsel %vm126, %v91, %v124
    %s128 = sld [smem:[#allocation7]]
    %s129 = scalar_lea.vmem %s2, %s128
    %v130 = vld [vmem:[%s129] sm:$0x1]
    %s131 = sld [smem:[#allocation7 + $0x1]]
    %s132 = scalar_lea.vmem %s2, %s131
    %v133 = vld [vmem:[%s132] sm:$0x1]
    %v134 = vmax.f32 %v130, %v133
    %s135 = sld [smem:[#allocation7 + $0x2]]
    %s136 = scalar_lea.vmem %s2, %s135
    %v137 = vld [vmem:[%s136] sm:$0x1]
    %v138 = vmax.f32 %v134, %v137
    %s139 = sld [smem:[#allocation7 + $0x3]]
    %s140 = scalar_lea.vmem %s2, %s139
    %v141 = vld [vmem:[%s140] sm:$0x1]
    %v142 = vmax.f32 %v138, %v141
    %s143 = sld [smem:[#allocation7 + $0x4]]
    %s144 = scalar_lea.vmem %s2, %s143
    %v145 = vld [vmem:[%s144] sm:$0x1]
    %v146 = vmax.f32 %v142, %v145
    %s147 = sld [smem:[#allocation7 + $0x5]]
    %s148 = scalar_lea.vmem %s2, %s147
    %v149 = vld [vmem:[%s148] sm:$0x1]
    %v150 = vmax.f32 %v146, %v149
    %s151 = sld [smem:[#allocation7 + $0x6]]
    %s152 = scalar_lea.vmem %s2, %s151
    %v153 = vld [vmem:[%s152] sm:$0x1]
    %v154 = vmax.f32 %v150, %v153
    %s155 = sld [smem:[#allocation7 + $0x7]]
    %s156 = scalar_lea.vmem %s2, %s155
    %v157 = vld [vmem:[%s156] sm:$0x1]
    %v158 = vmax.f32 %v154, %v157
    %s159 = sld [smem:[#allocation7 + $0x80]]
    %s160 = scalar_lea.vmem %s2, %s159
    %v161 = vld [vmem:[%s160] sm:$0x1]
    %s162 = sld [smem:[#allocation7 + $0x81]]
    %s163 = scalar_lea.vmem %s2, %s162
    %v164 = vld [vmem:[%s163] sm:$0x1]
    %v165 = vmax.f32 %v161, %v164
    %s166 = sld [smem:[#allocation7 + $0x82]]
    %s167 = scalar_lea.vmem %s2, %s166
    %v168 = vld [vmem:[%s167] sm:$0x1]
    %v169 = vmax.f32 %v165, %v168
    %s170 = sld [smem:[#allocation7 + $0x83]]
    %s171 = scalar_lea.vmem %s2, %s170
    %v172 = vld [vmem:[%s171] sm:$0x1]
    %v173 = vmax.f32 %v169, %v172
    %s174 = sld [smem:[#allocation7 + $0x84]]
    %s175 = scalar_lea.vmem %s2, %s174
    %v176 = vld [vmem:[%s175] sm:$0x1]
    %v177 = vmax.f32 %v173, %v176
    %s178 = sld [smem:[#allocation7 + $0x85]]
    %s179 = scalar_lea.vmem %s2, %s178
    %v180 = vld [vmem:[%s179] sm:$0x1]
    %v181 = vmax.f32 %v177, %v180
    %s182 = sld [smem:[#allocation7 + $0x86]]
    %s183 = scalar_lea.vmem %s2, %s182
    %v184 = vld [vmem:[%s183] sm:$0x1]
    %v185 = vmax.f32 %v181, %v184
    %s186 = sld [smem:[#allocation7 + $0x87]]
    %s187 = scalar_lea.vmem %s2, %s186
    %v188 = vld [vmem:[%s187] sm:$0x1]
    %v189 = vmax.f32 %v185, %v188
    %v191 = vrot.slane %v189, 7
    %v193 = vsel %vm126, %v158, %v191
    %v194 = vld [vmem:[%s3] sm:$0xff]
    %v195 = vld [vmem:[%s3 + $0x8] sm:$0xff]
    %v196 = vld [vmem:[%s3 + $0x10] sm:$0xff]
    %v197 = vld [vmem:[%s3 + $0x18] sm:$0xff]
    %v198 = vld [vmem:[%s4] sm:$0xff]
    %v199 = vld [vmem:[%s4 + $0x8] sm:$0xff]
    %v200 = vld [vmem:[%s4 + $0x10] sm:$0xff]
    %v201 = vld [vmem:[%s4 + $0x18] sm:$0xff]
    %vm202 = vcmask 261120
    %v204 = vsel %vm202, %v193, 0
    %206 = vmatprep.subr.mxu0 0.0
    %207 = vmatpush1.msra.mxu0 %v198
    %208 = vmatprep.subr.mxu0 0.0
    %209 = vmatpush1.msra.mxu0 %v199
    %210 = vmatprep.subr.mxu0 0.0
    %211 = vmatpush1.msra.mxu0 %v200
    %212 = vmatprep.subr.mxu0 0.0
    %213 = vmatpush1.msra.mxu0 %v201
    %214 = vmatprep.subr.mxu0 0.0
    %215 = vmatpush1.msra.mxu0 0.0
    %216 = vmatprep.subr.mxu0 0.0
    %217 = vmatpush1.msra.mxu0 0.0
    %218 = vmatprep.subr.mxu0 0.0
    %219 = vmatpush1.msra.mxu0 0.0
    %220 = vmatprep.subr.mxu0 0.0
    %221 = vmatpush1.msra.mxu0 0.0
    %222 = vmatprep.subr.mxu0 0.0
    %223 = vmatpush1.msra.mxu0 0.0
    %224 = vmatprep.subr.mxu0 0.0
    %225 = vmatpush1.msra.mxu0 0.0
    %226 = vmatprep.subr.mxu0 0.0
    %227 = vmatpush1.msra.mxu0 0.0
    %228 = vmatprep.subr.mxu0 0.0
    %229 = vmatpush1.msra.mxu0 0.0
    %230 = vmatprep.subr.mxu0 0.0
    %231 = vmatpush1.msra.mxu0 0.0
    %232 = vmatprep.subr.mxu0 0.0
    %233 = vmatpush1.msra.mxu0 0.0
    %234 = vmatprep.subr.mxu0 0.0
    %235 = vmatpush1.msra.mxu0 0.0
    %236 = vmatprep.subr.mxu0 0.0
    %237 = vmatpush1.msra.mxu0 0.0
    %238 = vmatprep.subr.mxu0 0.0
    %239 = vmatpush1.msra.mxu0 0.0
    %240 = vmatprep.subr.mxu0 0.0
    %241 = vmatpush1.msra.mxu0 0.0
    %242 = vmatprep.subr.mxu0 0.0
    %243 = vmatpush1.msra.mxu0 0.0
    %244 = vmatprep.subr.mxu0 0.0
    %245 = vmatpush1.msra.mxu0 0.0
    %246 = vmatprep.subr.mxu0 0.0
    %247 = vmatpush1.msra.mxu0 0.0
    %248 = vmatprep.subr.mxu0 0.0
    %249 = vmatpush1.msra.mxu0 0.0
    %250 = vmatprep.subr.mxu0 0.0
    %251 = vmatpush1.msra.mxu0 0.0
    %252 = vmatprep.subr.mxu0 0.0
    %253 = vmatpush1.msra.mxu0 0.0
    %254 = vmatprep.subr.mxu0 0.0
    %255 = vmatpush1.msra.mxu0 0.0
    %256 = vmatprep.subr.mxu0 0.0
    %257 = vmatpush1.msra.mxu0 0.0
    %258 = vmatprep.subr.mxu0 0.0
    %259 = vmatpush1.msra.mxu0 0.0
    %260 = vmatprep.subr.mxu0 0.0
    %261 = vmatpush1.msra.mxu0 0.0
    %262 = vmatprep.subr.mxu0 0.0
    %263 = vmatpush1.msra.mxu0 0.0
    %264 = vmatprep.subr.mxu0 0.0
    %265 = vmatpush1.msra.mxu0 0.0
    %266 = vmatprep.subr.mxu0 0.0
    %267 = vmatpush1.msra.mxu0 0.0
    %268 = vmatprep.subr.mxu0 0.0
    %269 = vmatpush1.msra.mxu0 0.0
    %270 = vmatprep.mubr.f32.mxu0 0.0
    %271 = vmatmul.mubr.f32.gmra.mrb[0].mxu0 %v204
    %v272 = vpop.f32.mrb[0].mxu0
    %v273 = vadd.f32 0.0, %v272
    %v274 = vpop.f32.mrb[0].mxu0
    %275 = vdwg.mxu0
    %v277 = vsel %vm202, %v127, 0
    %279 = vmatprep.subr.mxu0 0.0
    %280 = vmatpush1.msra.mxu0 %v194
    %281 = vmatprep.subr.mxu0 0.0
    %282 = vmatpush1.msra.mxu0 %v195
    %283 = vmatprep.subr.mxu0 0.0
    %284 = vmatpush1.msra.mxu0 %v196
    %285 = vmatprep.subr.mxu0 0.0
    %286 = vmatpush1.msra.mxu0 %v197
    %287 = vmatprep.subr.mxu0 0.0
    %288 = vmatpush1.msra.mxu0 0.0
    %289 = vmatprep.subr.mxu0 0.0
    %290 = vmatpush1.msra.mxu0 0.0
    %291 = vmatprep.subr.mxu0 0.0
    %292 = vmatpush1.msra.mxu0 0.0
    %293 = vmatprep.subr.mxu0 0.0
    %294 = vmatpush1.msra.mxu0 0.0
    %295 = vmatprep.subr.mxu0 0.0
    %296 = vmatpush1.msra.mxu0 0.0
    %297 = vmatprep.subr.mxu0 0.0
    %298 = vmatpush1.msra.mxu0 0.0
    %299 = vmatprep.subr.mxu0 0.0
    %300 = vmatpush1.msra.mxu0 0.0
    %301 = vmatprep.subr.mxu0 0.0
    %302 = vmatpush1.msra.mxu0 0.0
    %303 = vmatprep.subr.mxu0 0.0
    %304 = vmatpush1.msra.mxu0 0.0
    %305 = vmatprep.subr.mxu0 0.0
    %306 = vmatpush1.msra.mxu0 0.0
    %307 = vmatprep.subr.mxu0 0.0
    %308 = vmatpush1.msra.mxu0 0.0
    %309 = vmatprep.subr.mxu0 0.0
    %310 = vmatpush1.msra.mxu0 0.0
    %311 = vmatprep.subr.mxu0 0.0
    %312 = vmatpush1.msra.mxu0 0.0
    %313 = vmatprep.subr.mxu0 0.0
    %314 = vmatpush1.msra.mxu0 0.0
    %315 = vmatprep.subr.mxu0 0.0
    %316 = vmatpush1.msra.mxu0 0.0
    %317 = vmatprep.subr.mxu0 0.0
    %318 = vmatpush1.msra.mxu0 0.0
    %319 = vmatprep.subr.mxu0 0.0
    %320 = vmatpush1.msra.mxu0 0.0
    %321 = vmatprep.subr.mxu0 0.0
    %322 = vmatpush1.msra.mxu0 0.0
    %323 = vmatprep.subr.mxu0 0.0
    %324 = vmatpush1.msra.mxu0 0.0
    %325 = vmatprep.subr.mxu0 0.0
    %326 = vmatpush1.msra.mxu0 0.0
    %327 = vmatprep.subr.mxu0 0.0
    %328 = vmatpush1.msra.mxu0 0.0
    %329 = vmatprep.subr.mxu0 0.0
    %330 = vmatpush1.msra.mxu0 0.0
    %331 = vmatprep.subr.mxu0 0.0
    %332 = vmatpush1.msra.mxu0 0.0
    %333 = vmatprep.subr.mxu0 0.0
    %334 = vmatpush1.msra.mxu0 0.0
    %335 = vmatprep.subr.mxu0 0.0
    %336 = vmatpush1.msra.mxu0 0.0
    %337 = vmatprep.subr.mxu0 0.0
    %338 = vmatpush1.msra.mxu0 0.0
    %339 = vmatprep.subr.mxu0 0.0
    %340 = vmatpush1.msra.mxu0 0.0
    %341 = vmatprep.subr.mxu0 0.0
    %342 = vmatpush1.msra.mxu0 0.0
    %343 = vmatprep.mubr.f32.mxu0 0.0
    %344 = vmatmul.mubr.f32.gmra.mrb[0].mxu0 %v277
    %v345 = vpop.f32.mrb[0].mxu0
    %v346 = vadd.f32 %v273, %v345
    %v347 = vpop.f32.mrb[0].mxu0
    %348 = vdwg.mxu0
    %v349 = vld [vmem:[%s5] sm:$0x1]
    %v351 = vlaneseq
    %v352 = vshrl.u32 %v351, 7
    %v353 = vsub.s32 0, %v352
    %v354 = vrot.slane %v349, %v353
    %v356 = vadd.f32 %v346, %v354
    %v357 = vmax.f32 %v356, 0.0
    %v358 = vld [vmem:[%s6] sm:$0xff]
    %v359 = vld [vmem:[%s6 + $0x8] sm:$0xff]
    %v360 = vld [vmem:[%s6 + $0x10] sm:$0xff]
    %v361 = vld [vmem:[%s6 + $0x18] sm:$0xff]
    %v362 = vld [vmem:[%s7] sm:$0x1]
    %v364 = vlaneseq
    %v365 = vshrl.u32 %v364, 7
    %v366 = vsub.s32 0, %v365
    %v367 = vrot.slane %v362, %v366
    %v370 = vsel %vm202, %v357, 0
    %372 = vmatprep.subr.mxu0 0.0
    %373 = vmatpush1.msra.mxu0 %v358
    %374 = vmatprep.subr.mxu0 0.0
    %375 = vmatpush1.msra.mxu0 %v359
    %376 = vmatprep.subr.mxu0 0.0
    %377 = vmatpush1.msra.mxu0 %v360
    %378 = vmatprep.subr.mxu0 0.0
    %379 = vmatpush1.msra.mxu0 %v361
    %380 = vmatprep.subr.mxu0 0.0
    %381 = vmatpush1.msra.mxu0 0.0
    %382 = vmatprep.subr.mxu0 0.0
    %383 = vmatpush1.msra.mxu0 0.0
    %384 = vmatprep.subr.mxu0 0.0
    %385 = vmatpush1.msra.mxu0 0.0
    %386 = vmatprep.subr.mxu0 0.0
    %387 = vmatpush1.msra.mxu0 0.0
    %388 = vmatprep.subr.mxu0 0.0
    %389 = vmatpush1.msra.mxu0 0.0
    %390 = vmatprep.subr.mxu0 0.0
    %391 = vmatpush1.msra.mxu0 0.0
    %392 = vmatprep.subr.mxu0 0.0
    %393 = vmatpush1.msra.mxu0 0.0
    %394 = vmatprep.subr.mxu0 0.0
    %395 = vmatpush1.msra.mxu0 0.0
    %396 = vmatprep.subr.mxu0 0.0
    %397 = vmatpush1.msra.mxu0 0.0
    %398 = vmatprep.subr.mxu0 0.0
    %399 = vmatpush1.msra.mxu0 0.0
    %400 = vmatprep.subr.mxu0 0.0
    %401 = vmatpush1.msra.mxu0 0.0
    %402 = vmatprep.subr.mxu0 0.0
    %403 = vmatpush1.msra.mxu0 0.0
    %404 = vmatprep.subr.mxu0 0.0
    %405 = vmatpush1.msra.mxu0 0.0
    %406 = vmatprep.subr.mxu0 0.0
    %407 = vmatpush1.msra.mxu0 0.0
    %408 = vmatprep.subr.mxu0 0.0
    %409 = vmatpush1.msra.mxu0 0.0
    %410 = vmatprep.subr.mxu0 0.0
    %411 = vmatpush1.msra.mxu0 0.0
    %412 = vmatprep.subr.mxu0 0.0
    %413 = vmatpush1.msra.mxu0 0.0
    %414 = vmatprep.subr.mxu0 0.0
    %415 = vmatpush1.msra.mxu0 0.0
    %416 = vmatprep.subr.mxu0 0.0
    %417 = vmatpush1.msra.mxu0 0.0
    %418 = vmatprep.subr.mxu0 0.0
    %419 = vmatpush1.msra.mxu0 0.0
    %420 = vmatprep.subr.mxu0 0.0
    %421 = vmatpush1.msra.mxu0 0.0
    %422 = vmatprep.subr.mxu0 0.0
    %423 = vmatpush1.msra.mxu0 0.0
    %424 = vmatprep.subr.mxu0 0.0
    %425 = vmatpush1.msra.mxu0 0.0
    %426 = vmatprep.subr.mxu0 0.0
    %427 = vmatpush1.msra.mxu0 0.0
    %428 = vmatprep.subr.mxu0 0.0
    %429 = vmatpush1.msra.mxu0 0.0
    %430 = vmatprep.subr.mxu0 0.0
    %431 = vmatpush1.msra.mxu0 0.0
    %432 = vmatprep.subr.mxu0 0.0
    %433 = vmatpush1.msra.mxu0 0.0
    %434 = vmatprep.subr.mxu0 0.0
    %435 = vmatpush1.msra.mxu0 0.0
    %436 = vmatprep.mubr.f32.mxu0 0.0
    %437 = vmatmul.mubr.f32.gmra.mrb[0].mxu0 %v370
    %v438 = vpop.f32.mrb[0].mxu0
    %v439 = vadd.f32 %v367, %v438
    %v440 = vpop.f32.mrb[0].mxu0
    %441 = vdwg.mxu0
    %v442 = vmax.f32 %v439, 0.0
    %v443 = vld [vmem:[%s8] sm:$0x1]
    %v445 = vlaneseq
    %v446 = vshrl.u32 %v445, 7
    %v447 = vsub.s32 0, %v446
    %v448 = vrot.slane %v443, %v447
    %v450 = vmul.f32 %v442, %v448
    %vm451 = vcmask 254976
    %v452 = vsel %vm451, %v450, 0.0
    %453 = vadd.xlane.f32.xlu0 %v452
    %v454 = vpop.xlane.xlu0 %453
    %v455 = vld [vmem:[#allocation2] sm:$0x1]
    %v457 = vlaneseq
    %v458 = vshrl.u32 %v457, 7
    %v459 = vsub.s32 0, %v458
    %v460 = vrot.slane %v455, %v459
    %v462 = vadd.f32 %v454, %v460
    %v463 = vxor.u32 %v462, 2147483648
    %v464 = vmul.f32 %v463, 1.442695
    %v465 = vpow.pop %v464
    %v466 = vadd.f32 %v465, 1.0
    %v467 = vrcp.pop %v466
    %v468 = vmul.f32 1.0, %v467
    %470 = vset.pattern.permute.xlu0 0
    %471 = vperm.xlu0 %470, %v468
    %v472 = vpop.permute.xlu0 %471
    %474 = vst [vmem:[#allocation8] sm:$0x3] %v472
    // Predicated region
    $region50: #{tpu_custom_call.1} parent=1 // pred_check
      _
    $region51: #{tpu_custom_call.1} parent=1 // pred_check_branch
      %476 = sbr.rel (0) target = $region53
    $region52: #{tpu_custom_call.1} parent=1 // pred_region
      %s478 = ssub.s32 32, 32
      %479 = vsyncadd [#allocation4], %s478
      %s481 = sshll.u32 [#allocation8], 4
      %s482 = int_to_ptr.vmem [resolvable:$true] %s481
      %484 = dma.vmem_to_hbm [thread:$0]  %s482, 32, %s10, [#allocation4]
    $region53: #{tpu_custom_call.1} parent=1 // pred_fallthru
      _
    // Predicated region
    $region54: #{tpu_custom_call.1} parent=1 // pred_check
      _
    $region55: #{tpu_custom_call.1} parent=1 // pred_check_branch
      %486 = sbr.rel (0) target = $region57
    $region56: #{tpu_custom_call.1} parent=1 // pred_region
      %487 = dma.done [#allocation4], 32
    $region57: #{tpu_custom_call.1} parent=1 // pred_fallthru
      _
    %488 = vsyncpa [#allocation4], 1
    %489 = vsyncpa [#allocation5], 1
    %490 = vsyncpa [#allocation6], 1

</llo_original>
